<compile_context>
chip_gen: v5e
topology: v5e:2x2
jax: 0.10.0
libtpu: 0.0.40
codegen_flags: <defaults>
</compile_context>

<pallas_src>
import functools

import jax
import jax.numpy as jnp
from jax.experimental import pallas as pl
from jax.experimental.pallas import tpu as pltpu

LANE = 128
SUBLANE = 8


def _round_up(n: int, m: int) -> int:
    return ((n + m - 1) // m) * m


# ---------------------------------------------------------------------------
# Kernel body: one batch tile, all layers fused.
# ---------------------------------------------------------------------------
def fc_classifier_kernel(x_ref, w1_ref, b1_ref, w2_ref, b2_ref,
                         wo_ref, bo_ref, out_ref):
    # hidden layer 1: tanh(x @ W1 + b1)   (bf16 MXU operands, f32 accumulate)
    h = jnp.tanh(
        jnp.dot(x_ref[...], w1_ref[...], preferred_element_type=jnp.float32)
        + b1_ref[...]
    )
    # hidden layer 2: tanh(h @ W2 + b2)
    h = jnp.tanh(
        jnp.dot(h.astype(w2_ref.dtype), w2_ref[...],
                preferred_element_type=jnp.float32)
        + b2_ref[...]
    )
    # output projection; padded class columns get bias -1e9 -> exp() == 0
    logits = (
        jnp.dot(h.astype(wo_ref.dtype), wo_ref[...],
                preferred_element_type=jnp.float32)
        + bo_ref[...]
    )
    # numerically stable softmax over the (padded, lane-dense) class dim
    m = jnp.max(logits, axis=-1, keepdims=True)
    e = jnp.exp(logits - m)
    denom = jnp.sum(e, axis=-1, keepdims=True)
    out_ref[...] = e * pl.reciprocal(denom, approx=True)


# ---------------------------------------------------------------------------
# One-time parameter prep: pad to lane-dense shapes, cast MXU operands to bf16.
# ---------------------------------------------------------------------------
def prepare_params(params):
    w1, b1 = params["w1"], params["b1"]   # (F, H), (1, H)
    w2, b2 = params["w2"], params["b2"]   # (H, H), (1, H)
    wo, bo = params["wo"], params["bo"]   # (H, C), (1, C)

    F, H = w1.shape
    C = wo.shape[1]
    Fp, Hp, Cp = _round_up(F, LANE), _round_up(H, LANE), _round_up(C, LANE)

    w1p = jnp.zeros((Fp, Hp), jnp.bfloat16).at[:F, :H].set(w1.astype(jnp.bfloat16))
    b1p = jnp.zeros((1, Hp), jnp.float32).at[:, :H].set(b1)
    w2p = jnp.zeros((Hp, Hp), jnp.bfloat16).at[:H, :H].set(w2.astype(jnp.bfloat16))
    b2p = jnp.zeros((1, Hp), jnp.float32).at[:, :H].set(b2)
    wop = jnp.zeros((Hp, Cp), jnp.bfloat16).at[:H, :C].set(wo.astype(jnp.bfloat16))
    # phantom classes: huge negative bias keeps softmax mass on real classes
    bop = jnp.full((1, Cp), -1e9, jnp.float32).at[:, :C].set(bo)

    padded = dict(w1=w1p, b1=b1p, w2=w2p, b2=b2p, wo=wop, bo=bop)
    dims = (F, H, C)                      # static python ints
    return padded, dims


# ---------------------------------------------------------------------------
# Jitted forward: batch padding + pallas_call + output slice.
# ---------------------------------------------------------------------------
@functools.partial(jax.jit, static_argnames=("dims", "tile_b"))
def fc_classifier_forward(x, padded, dims, tile_b=1024):
    F, H, C = dims
    Fp = padded["w1"].shape[0]
    Hp = padded["w2"].shape[0]
    Cp = padded["wo"].shape[1]

    B = x.shape[0]
    xf = x.reshape(B, -1)                 # module feeds flattened features
    assert xf.shape[1] == F, "feature dim mismatch vs. parameters"

    # batch tiling: stream x through the grid, weights stay resident
    tb = max(SUBLANE, min(tile_b, _round_up(B, SUBLANE)))
    Bp = _round_up(B, tb)
    xp = jnp.zeros((Bp, Fp), jnp.bfloat16).at[:B, :F].set(xf.astype(jnp.bfloat16))

    grid = (Bp // tb,)
    const = lambda i: (0, 0)              # weights: same block every step
    out = pl.pallas_call(
        fc_classifier_kernel,
        out_shape=jax.ShapeDtypeStruct((Bp, Cp), jnp.float32),
        grid=grid,
        in_specs=[
            pl.BlockSpec((tb, Fp), lambda i: (i, 0)),       # x tile (streamed)
            pl.BlockSpec((Fp, Hp), const),                  # W1 (resident)
            pl.BlockSpec((1, Hp), const),                   # b1
            pl.BlockSpec((Hp, Hp), const),                  # W2
            pl.BlockSpec((1, Hp), const),                   # b2
            pl.BlockSpec((Hp, Cp), const),                  # Wo
            pl.BlockSpec((1, Cp), const),                   # bo
        ],
        out_specs=pl.BlockSpec((tb, Cp), lambda i: (i, 0)),
        compiler_params=pltpu.CompilerParams(
            dimension_semantics=("parallel",),              # megacore on v7x
            vmem_limit_bytes=32 * 1024 * 1024,              # safe on v5e..v7x
        ),
    )(xp, padded["w1"], padded["b1"], padded["w2"], padded["b2"],
      padded["wo"], padded["bo"])

    return out[:B, :C]                    # strip batch + class padding


def fc_classifier_net(x, params, *, tile_b: int = 1024):
    """Convenience wrapper: prep params + run forward."""
    padded, dims = prepare_params(params)
    return fc_classifier_forward(x, padded, dims, tile_b)


# ---------------------------------------------------------------------------
# Deterministic synthetic parameters & pure-JAX reference.
# ---------------------------------------------------------------------------
def init_params(key, in_dim_flat, hidden_dim, num_classes):
    """PyTorch Linear parameters stored pre-transposed as (fan_in, fan_out)."""
    ks = jax.random.split(key, 6)
    w1 = jax.random.normal(ks[0], (in_dim_flat, hidden_dim), jnp.float32) * 0.05
    b1 = jax.random.normal(ks[1], (1, hidden_dim), jnp.float32) * 0.05
    w2 = jax.random.normal(ks[2], (hidden_dim, hidden_dim), jnp.float32) * 0.05
    b2 = jax.random.normal(ks[3], (1, hidden_dim), jnp.float32) * 0.05
    wo = jax.random.normal(ks[4], (hidden_dim, num_classes), jnp.float32) * 0.05
    bo = jax.random.normal(ks[5], (1, num_classes), jnp.float32) * 0.05
    return dict(w1=w1, b1=b1, w2=w2, b2=b2, wo=wo, bo=bo)


def reference(x, p):
    """Full-f32 reference with the original module's semantics."""
    xf = x.reshape(x.shape[0], -1)
    h = jnp.tanh(xf @ p["w1"] + p["b1"])
    h = jnp.tanh(h @ p["w2"] + p["b2"])
    logits = h @ p["wo"] + p["bo"]
    return jax.nn.softmax(logits, axis=-1)


if __name__ == "__main__":
    # in_dim = (16, 16) -> flattened feature size 256; module defaults:
    # hidden_dim=128, num_layers=2, activation='tanh'
    batch, h, w = 2, 16, 16
    in_dim_flat = h * w
    hidden_dim = 128
    num_classes = 10

    key = jax.random.PRNGKey(0)
    kx, kp = jax.random.split(key)
    x = jax.random.normal(kx, (batch, h, w), jnp.float32)
    params = init_params(kp, in_dim_flat, hidden_dim, num_classes)

    out = jax.block_until_ready(fc_classifier_net(x, params))
    ref = reference(x, params)

    assert out.shape == (batch, num_classes)
    # bf16 MXU operands + approx reciprocal -> relaxed (but still tight) tolerances
    assert jnp.allclose(jnp.sum(out, axis=-1), 1.0, atol=1e-2)
    assert jnp.allclose(out, ref, atol=2e-2, rtol=0.0)
    print("KERNEL_OK")
</pallas_src>

<mosaic_0001>
module attributes {stable_mosaic.version = 11 : i64} {
  func.func @fc_classifier_kernel(%arg0: i32, %arg1: memref<8x256xbf16, #tpu.memory_space<vmem>>, %arg2: memref<256x128xbf16, #tpu.memory_space<vmem>>, %arg3: memref<1x128xf32, #tpu.memory_space<vmem>>, %arg4: memref<128x128xbf16, #tpu.memory_space<vmem>>, %arg5: memref<1x128xf32, #tpu.memory_space<vmem>>, %arg6: memref<128x128xbf16, #tpu.memory_space<vmem>>, %arg7: memref<1x128xf32, #tpu.memory_space<vmem>>, %arg8: memref<8x128xf32, #tpu.memory_space<vmem>>) attributes {dimension_semantics = [#tpu.dimension_semantics<parallel>], iteration_bounds = array<i64: 1>, scalar_prefetch = 0 : i64, scratch_operands = 0 : i64, tpu.core_type = #tpu.core_type<tc>, window_params = [{transform_indices = @transform_0, window_bounds = array<i64: 8, 256>}, {pipeline_mode = #tpu.pipeline_mode<synchronous>, transform_indices = @transform_1, window_bounds = array<i64: 256, 128>}, {pipeline_mode = #tpu.pipeline_mode<synchronous>, transform_indices = @transform_2, window_bounds = array<i64: 1, 128>}, {pipeline_mode = #tpu.pipeline_mode<synchronous>, transform_indices = @transform_3, window_bounds = array<i64: 128, 128>}, {pipeline_mode = #tpu.pipeline_mode<synchronous>, transform_indices = @transform_4, window_bounds = array<i64: 1, 128>}, {pipeline_mode = #tpu.pipeline_mode<synchronous>, transform_indices = @transform_5, window_bounds = array<i64: 128, 128>}, {pipeline_mode = #tpu.pipeline_mode<synchronous>, transform_indices = @transform_6, window_bounds = array<i64: 1, 128>}, {transform_indices = @transform_7, window_bounds = array<i64: 8, 128>}]} {
    %c0 = arith.constant 0 : index
    %c0_0 = arith.constant 0 : index
    %0 = vector.load %arg1[%c0, %c0_0] : memref<8x256xbf16, #tpu.memory_space<vmem>>, vector<8x256xbf16>
    %c0_1 = arith.constant 0 : index
    %c0_2 = arith.constant 0 : index
    %1 = vector.load %arg2[%c0_1, %c0_2] : memref<256x128xbf16, #tpu.memory_space<vmem>>, vector<256x128xbf16>
    %cst = arith.constant dense<0.000000e+00> : vector<8x128xf32>
    %2 = tpu.matmul %0, %1, %cst {dimension_numbers = #tpu.dot_dimension_numbers<[1], [0], [0], [1], [0, 0, 1, 1], [], []>} : vector<8x256xbf16>, vector<256x128xbf16>, vector<8x128xf32> -> vector<8x128xf32>
    %c0_3 = arith.constant 0 : index
    %c0_4 = arith.constant 0 : index
    %3 = vector.load %arg3[%c0_3, %c0_4] : memref<1x128xf32, #tpu.memory_space<vmem>>, vector<1x128xf32>
    %4 = vector.broadcast %3 : vector<1x128xf32> to vector<8x128xf32>
    %5 = arith.addf %2, %4 : vector<8x128xf32>
    %6 = math.tanh %5 : vector<8x128xf32>
    %7 = arith.truncf %6 : vector<8x128xf32> to vector<8x128xbf16>
    %c0_5 = arith.constant 0 : index
    %c0_6 = arith.constant 0 : index
    %8 = vector.load %arg4[%c0_5, %c0_6] : memref<128x128xbf16, #tpu.memory_space<vmem>>, vector<128x128xbf16>
    %cst_7 = arith.constant dense<0.000000e+00> : vector<8x128xf32>
    %9 = tpu.matmul %7, %8, %cst_7 {dimension_numbers = #tpu.dot_dimension_numbers<[1], [0], [0], [1], [0, 0, 1, 1], [], []>} : vector<8x128xbf16>, vector<128x128xbf16>, vector<8x128xf32> -> vector<8x128xf32>
    %c0_8 = arith.constant 0 : index
    %c0_9 = arith.constant 0 : index
    %10 = vector.load %arg5[%c0_8, %c0_9] : memref<1x128xf32, #tpu.memory_space<vmem>>, vector<1x128xf32>
    %11 = vector.broadcast %10 : vector<1x128xf32> to vector<8x128xf32>
    %12 = arith.addf %9, %11 : vector<8x128xf32>
    %13 = math.tanh %12 : vector<8x128xf32>
    %14 = arith.truncf %13 : vector<8x128xf32> to vector<8x128xbf16>
    %c0_10 = arith.constant 0 : index
    %c0_11 = arith.constant 0 : index
    %15 = vector.load %arg6[%c0_10, %c0_11] : memref<128x128xbf16, #tpu.memory_space<vmem>>, vector<128x128xbf16>
    %cst_12 = arith.constant dense<0.000000e+00> : vector<8x128xf32>
    %16 = tpu.matmul %14, %15, %cst_12 {dimension_numbers = #tpu.dot_dimension_numbers<[1], [0], [0], [1], [0, 0, 1, 1], [], []>} : vector<8x128xbf16>, vector<128x128xbf16>, vector<8x128xf32> -> vector<8x128xf32>
    %c0_13 = arith.constant 0 : index
    %c0_14 = arith.constant 0 : index
    %17 = vector.load %arg7[%c0_13, %c0_14] : memref<1x128xf32, #tpu.memory_space<vmem>>, vector<1x128xf32>
    %18 = vector.broadcast %17 : vector<1x128xf32> to vector<8x128xf32>
    %19 = arith.addf %16, %18 : vector<8x128xf32>
    %cst_15 = arith.constant dense<0xFF800000> : vector<8xf32>
    %20 = vector.multi_reduction <maximumf>, %19, %cst_15 [1] : vector<8x128xf32> to vector<8xf32>
    %21 = vector.shape_cast %20 : vector<8xf32> to vector<8x1xf32>
    %22 = vector.broadcast %21 : vector<8x1xf32> to vector<8x128xf32>
    %23 = arith.subf %19, %22 : vector<8x128xf32>
    %24 = math.exp %23 : vector<8x128xf32>
    %cst_16 = arith.constant dense<0.000000e+00> : vector<8xf32>
    %25 = vector.multi_reduction <add>, %24, %cst_16 [1] : vector<8x128xf32> to vector<8xf32>
    %26 = vector.shape_cast %25 : vector<8xf32> to vector<8x1xf32>
    %27 = tpu.reciprocal %26 {approx = true} : vector<8x1xf32> -> vector<8x1xf32>
    %28 = vector.broadcast %27 : vector<8x1xf32> to vector<8x128xf32>
    %29 = arith.mulf %24, %28 : vector<8x128xf32>
    %c0_17 = arith.constant 0 : index
    %c0_18 = arith.constant 0 : index
    %30 = vector.load %arg8[%c0_17, %c0_18] : memref<8x128xf32, #tpu.memory_space<vmem>>, vector<8x128xf32>
    tpu.vector_store %arg8[%c0_17, %c0_18], %29 {strides = array<i32>} : memref<8x128xf32, #tpu.memory_space<vmem>>, vector<8x128xf32>,
    return
  }
  func.func @transform_0(%arg0: i32) -> (i32, i32) {
    %c0_i32 = arith.constant 0 : i32
    %c0_i32_0 = arith.constant 0 : i32
    return %arg0, %c0_i32 : i32, i32
  }
  func.func @transform_1(%arg0: i32) -> (i32, i32) {
    %c0_i32 = arith.constant 0 : i32
    %c0_i32_0 = arith.constant 0 : i32
    %c0_i32_1 = arith.constant 0 : i32
    return %c0_i32, %c0_i32_0 : i32, i32
  }
  func.func @transform_2(%arg0: i32) -> (i32, i32) {
    %c0_i32 = arith.constant 0 : i32
    %c0_i32_0 = arith.constant 0 : i32
    %c0_i32_1 = arith.constant 0 : i32
    return %c0_i32, %c0_i32_0 : i32, i32
  }
  func.func @transform_3(%arg0: i32) -> (i32, i32) {
    %c0_i32 = arith.constant 0 : i32
    %c0_i32_0 = arith.constant 0 : i32
    %c0_i32_1 = arith.constant 0 : i32
    return %c0_i32, %c0_i32_0 : i32, i32
  }
  func.func @transform_4(%arg0: i32) -> (i32, i32) {
    %c0_i32 = arith.constant 0 : i32
    %c0_i32_0 = arith.constant 0 : i32
    %c0_i32_1 = arith.constant 0 : i32
    return %c0_i32, %c0_i32_0 : i32, i32
  }
  func.func @transform_5(%arg0: i32) -> (i32, i32) {
    %c0_i32 = arith.constant 0 : i32
    %c0_i32_0 = arith.constant 0 : i32
    %c0_i32_1 = arith.constant 0 : i32
    return %c0_i32, %c0_i32_0 : i32, i32
  }
  func.func @transform_6(%arg0: i32) -> (i32, i32) {
    %c0_i32 = arith.constant 0 : i32
    %c0_i32_0 = arith.constant 0 : i32
    %c0_i32_1 = arith.constant 0 : i32
    return %c0_i32, %c0_i32_0 : i32, i32
  }
  func.func @transform_7(%arg0: i32) -> (i32, i32) {
    %c0_i32 = arith.constant 0 : i32
    %c0_i32_0 = arith.constant 0 : i32
    return %arg0, %c0_i32 : i32, i32
  }
}

</mosaic_0001>

<llo_original>
// kernel: fc_classifier_forward.1
$region0: #{fc_classifier_forward.1}
  #allocation0 [shape = 'u32[]', space=smem, size = 0x4, offset = 0x4, fixed_abs, tag = 'smem constant byte address 0x4 - core index']
  #allocation1 [shape = 'u32[72,128]{1,0:T(1,128)}', space=vmem, size = 0x9000, scoped, tag = 'internal scratch']
  %s0 = inlined_call_operand.vmem [shape: bf16[8,256], index: 0, kind: input, shape index: {}]
  %s1 = inlined_call_operand.hbm [shape: bf16[256,128], index: 1, kind: input, shape index: {}]
  %s2 = inlined_call_operand.vmem [shape: f32[1,128], index: 2, kind: input, shape index: {}]
  %s3 = inlined_call_operand.vmem [shape: bf16[128,128], index: 3, kind: input, shape index: {}]
  %s4 = inlined_call_operand.vmem [shape: f32[1,128], index: 4, kind: input, shape index: {}]
  %s5 = inlined_call_operand.hbm [shape: bf16[128,128], index: 5, kind: input, shape index: {}]
  %s6 = inlined_call_operand.vmem [shape: f32[1,128], index: 6, kind: input, shape index: {}]
  %s7 = inlined_call_operand.vmem [shape: f32[8,128], index: 7, kind: output, shape index: {}]
  %s8 = sld [smem:[#allocation0]]
  $region46: #{fc_classifier_forward.1} parent=0
    _
  %s10 = ssub.s32 1, %s8
  %s11 = scalar_select 0, %s10, %s8
  $region1: #{fc_classifier_forward.1} parent=0
    #allocation2 [shape = 'u8[65536]{0}', space=vmem, size = 0x10000, scoped, tag = 'input window, operand 1, single buffered']
    #allocation3 [shape = 's32[1]{0}', space=sflag, size = 0x4, scoped, tag = 'scoped memory for fc_classifier_forward.1']
    #allocation4 [shape = 'u8[32768]{0}', space=vmem, size = 0x8000, scoped, tag = 'input window, operand 5, single buffered']
    #allocation5 [shape = 's32[1]{0}', space=sflag, size = 0x4, scoped, tag = 'scoped memory for fc_classifier_forward.1']
    %12 = vsyncpa [#allocation3], 0
    %13 = vsyncpa [#allocation5], 0
    // Predicated region
    $region2: #{fc_classifier_forward.1} parent=1 // pred_check
      _
    $region3: #{fc_classifier_forward.1} parent=1 // pred_check_branch
      %15 = sbr.rel (0) target = $region5
    $region4: #{fc_classifier_forward.1} parent=1 // pred_region
      _
    $region5: #{fc_classifier_forward.1} parent=1 // pred_fallthru
      _
    // Predicated region
    $region6: #{fc_classifier_forward.1} parent=1 // pred_check
      _
    $region7: #{fc_classifier_forward.1} parent=1 // pred_check_branch
      %17 = sbr.rel (0) target = $region9
    $region8: #{fc_classifier_forward.1} parent=1 // pred_region
      %19 = vsyncadd [#allocation3], 0
      %s20 = sshll.u32 %s1, 4
      %s21 = int_to_ptr.hbm [resolvable:$true] %s20
      %s22 = sshll.u32 [#allocation2], 4
      %s23 = int_to_ptr.vmem [resolvable:$true] %s22
      %28 = dma.hbm_to_vmem [thread:$0]  %s21, 2048, %s23, [#allocation3], 64, 64, 4
    $region9: #{fc_classifier_forward.1} parent=1 // pred_fallthru
      _
    // Predicated region
    $region10: #{fc_classifier_forward.1} parent=1 // pred_check
      _
    $region11: #{fc_classifier_forward.1} parent=1 // pred_check_branch
      %30 = sbr.rel (0) target = $region13
    $region12: #{fc_classifier_forward.1} parent=1 // pred_region
      _
    $region13: #{fc_classifier_forward.1} parent=1 // pred_fallthru
      _
    // Predicated region
    $region14: #{fc_classifier_forward.1} parent=1 // pred_check
      _
    $region15: #{fc_classifier_forward.1} parent=1 // pred_check_branch
      %32 = sbr.rel (0) target = $region17
    $region16: #{fc_classifier_forward.1} parent=1 // pred_region
      _
    $region17: #{fc_classifier_forward.1} parent=1 // pred_fallthru
      _
    // Predicated region
    $region18: #{fc_classifier_forward.1} parent=1 // pred_check
      _
    $region19: #{fc_classifier_forward.1} parent=1 // pred_check_branch
      %34 = sbr.rel (0) target = $region21
    $region20: #{fc_classifier_forward.1} parent=1 // pred_region
      _
    $region21: #{fc_classifier_forward.1} parent=1 // pred_fallthru
      _
    // Predicated region
    $region22: #{fc_classifier_forward.1} parent=1 // pred_check
      _
    $region23: #{fc_classifier_forward.1} parent=1 // pred_check_branch
      %36 = sbr.rel (0) target = $region25
    $region24: #{fc_classifier_forward.1} parent=1 // pred_region
      %38 = vsyncadd [#allocation5], 0
      %s39 = sshll.u32 %s5, 4
      %s40 = int_to_ptr.hbm [resolvable:$true] %s39
      %s41 = sshll.u32 [#allocation4], 4
      %s42 = int_to_ptr.vmem [resolvable:$true] %s41
      %47 = dma.hbm_to_vmem [thread:$0]  %s40, 1024, %s42, [#allocation5], 64, 64, 4
    $region25: #{fc_classifier_forward.1} parent=1 // pred_fallthru
      _
    // Predicated region
    $region26: #{fc_classifier_forward.1} parent=1 // pred_check
      _
    $region27: #{fc_classifier_forward.1} parent=1 // pred_check_branch
      %49 = sbr.rel (0) target = $region29
    $region28: #{fc_classifier_forward.1} parent=1 // pred_region
      _
    $region29: #{fc_classifier_forward.1} parent=1 // pred_fallthru
      _
    // Predicated region
    $region30: #{fc_classifier_forward.1} parent=1 // pred_check
      _
    $region31: #{fc_classifier_forward.1} parent=1 // pred_check_branch
      %51 = sbr.rel (0) target = $region33
    $region32: #{fc_classifier_forward.1} parent=1 // pred_region
      %53 = dma.done [#allocation3], 2048
    $region33: #{fc_classifier_forward.1} parent=1 // pred_fallthru
      _
    // Predicated region
    $region34: #{fc_classifier_forward.1} parent=1 // pred_check
      _
    $region35: #{fc_classifier_forward.1} parent=1 // pred_check_branch
      %55 = sbr.rel (0) target = $region37
    $region36: #{fc_classifier_forward.1} parent=1 // pred_region
      %57 = dma.done [#allocation5], 1024
    $region37: #{fc_classifier_forward.1} parent=1 // pred_fallthru
      _
    %v58 = vld [vmem:[%s0] sm:$0xff]
    %v59 = vld [vmem:[#allocation2] sm:$0xf]
    %v60 = vld [vmem:[#allocation2 + $0x4] sm:$0xf]
    %v61 = vld [vmem:[#allocation2 + $0x8] sm:$0xf]
    %v62 = vld [vmem:[#allocation2 + $0xc] sm:$0xf]
    %v63 = vld [vmem:[#allocation2 + $0x10] sm:$0xf]
    %v64 = vld [vmem:[#allocation2 + $0x14] sm:$0xf]
    %v65 = vld [vmem:[#allocation2 + $0x18] sm:$0xf]
    %v66 = vld [vmem:[#allocation2 + $0x1c] sm:$0xf]
    %v67 = vld [vmem:[#allocation2 + $0x20] sm:$0xf]
    %v68 = vld [vmem:[#allocation2 + $0x24] sm:$0xf]
    %v69 = vld [vmem:[#allocation2 + $0x28] sm:$0xf]
    %v70 = vld [vmem:[#allocation2 + $0x2c] sm:$0xf]
    %v71 = vld [vmem:[#allocation2 + $0x30] sm:$0xf]
    %v72 = vld [vmem:[#allocation2 + $0x34] sm:$0xf]
    %v73 = vld [vmem:[#allocation2 + $0x38] sm:$0xf]
    %v74 = vld [vmem:[#allocation2 + $0x3c] sm:$0xf]
    %v75 = vld [vmem:[#allocation2 + $0x40] sm:$0xf]
    %v76 = vld [vmem:[#allocation2 + $0x44] sm:$0xf]
    %v77 = vld [vmem:[#allocation2 + $0x48] sm:$0xf]
    %v78 = vld [vmem:[#allocation2 + $0x4c] sm:$0xf]
    %v79 = vld [vmem:[#allocation2 + $0x50] sm:$0xf]
    %v80 = vld [vmem:[#allocation2 + $0x54] sm:$0xf]
    %v81 = vld [vmem:[#allocation2 + $0x58] sm:$0xf]
    %v82 = vld [vmem:[#allocation2 + $0x5c] sm:$0xf]
    %v83 = vld [vmem:[#allocation2 + $0x60] sm:$0xf]
    %v84 = vld [vmem:[#allocation2 + $0x64] sm:$0xf]
    %v85 = vld [vmem:[#allocation2 + $0x68] sm:$0xf]
    %v86 = vld [vmem:[#allocation2 + $0x6c] sm:$0xf]
    %v87 = vld [vmem:[#allocation2 + $0x70] sm:$0xf]
    %v88 = vld [vmem:[#allocation2 + $0x74] sm:$0xf]
    %v89 = vld [vmem:[#allocation2 + $0x78] sm:$0xf]
    %v90 = vld [vmem:[#allocation2 + $0x7c] sm:$0xf]
    %v91 = vld [vmem:[%s2] sm:$0x1]
    %v93 = vperm.slane %v91, 0
    %v96 = vunpack.c.l.b16 %v58
    %v97 = vunpack.c.h.b16 %v58
    %v98 = vpack.c.b16 %v96, %v96
    %v99 = vpack.c.b16 %v97, %v97
    %v134 = vunpack.c.l.b16 %v59
    %v135 = vunpack.c.l.b16 %v60
    %v136 = vunpack.c.l.b16 %v61
    %v137 = vunpack.c.l.b16 %v62
    %v138 = vunpack.c.l.b16 %v63
    %v139 = vunpack.c.l.b16 %v64
    %v140 = vunpack.c.l.b16 %v65
    %v141 = vunpack.c.l.b16 %v66
    %v142 = vunpack.c.l.b16 %v67
    %v143 = vunpack.c.l.b16 %v68
    %v144 = vunpack.c.l.b16 %v69
    %v145 = vunpack.c.l.b16 %v70
    %v146 = vunpack.c.l.b16 %v71
    %v147 = vunpack.c.l.b16 %v72
    %v148 = vunpack.c.l.b16 %v73
    %v149 = vunpack.c.l.b16 %v74
    %v150 = vunpack.c.l.b16 %v75
    %v151 = vunpack.c.l.b16 %v76
    %v152 = vunpack.c.l.b16 %v77
    %v153 = vunpack.c.l.b16 %v78
    %v154 = vunpack.c.l.b16 %v79
    %v155 = vunpack.c.l.b16 %v80
    %v156 = vunpack.c.l.b16 %v81
    %v157 = vunpack.c.l.b16 %v82
    %v158 = vunpack.c.l.b16 %v83
    %v159 = vunpack.c.l.b16 %v84
    %v160 = vunpack.c.l.b16 %v85
    %v161 = vunpack.c.l.b16 %v86
    %v162 = vunpack.c.l.b16 %v87
    %v163 = vunpack.c.l.b16 %v88
    %v164 = vunpack.c.l.b16 %v89
    %v165 = vunpack.c.l.b16 %v90
    %v166 = vpack.c.b16 %v135, %v134
    %v167 = vpack.c.b16 %v137, %v136
    %v168 = vpack.c.b16 %v139, %v138
    %v169 = vpack.c.b16 %v141, %v140
    %v170 = vpack.c.b16 %v143, %v142
    %v171 = vpack.c.b16 %v145, %v144
    %v172 = vpack.c.b16 %v147, %v146
    %v173 = vpack.c.b16 %v149, %v148
    %v174 = vpack.c.b16 %v151, %v150
    %v175 = vpack.c.b16 %v153, %v152
    %v176 = vpack.c.b16 %v155, %v154
    %v177 = vpack.c.b16 %v157, %v156
    %v178 = vpack.c.b16 %v159, %v158
    %v179 = vpack.c.b16 %v161, %v160
    %v180 = vpack.c.b16 %v163, %v162
    %v181 = vpack.c.b16 %v165, %v164
    %198 = vmatpush.bf16.msra.mxu0 %v173
    %199 = vmatpush.bf16.msra.mxu0 %v172
    %200 = vmatpush.bf16.msra.mxu0 %v171
    %201 = vmatpush.bf16.msra.mxu0 %v170
    %202 = vmatpush.bf16.msra.mxu0 %v169
    %203 = vmatpush.bf16.msra.mxu0 %v168
    %204 = vmatpush.bf16.msra.mxu0 %v167
    %205 = vmatpush.bf16.msra.mxu0 %v166
    %206 = vmatmul.bf16.gmra.mxu0 %v98
    %v207 = vpop.f32.mrf.mxu0
    %v208 = vadd.f32 %v93, %v207
    %v209 = vpop.f32.mrf.mxu0
    %210 = vdwg.mxu0
    %211 = vmatpush.bf16.msra.mxu0 %v181
    %212 = vmatpush.bf16.msra.mxu0 %v180
    %213 = vmatpush.bf16.msra.mxu0 %v179
    %214 = vmatpush.bf16.msra.mxu0 %v178
    %215 = vmatpush.bf16.msra.mxu0 %v177
    %216 = vmatpush.bf16.msra.mxu0 %v176
    %217 = vmatpush.bf16.msra.mxu0 %v175
    %218 = vmatpush.bf16.msra.mxu0 %v174
    %219 = vmatmul.bf16.gmra.mxu0 %v99
    %v220 = vpop.f32.mrf.mxu0
    %v221 = vadd.f32 %v208, %v220
    %v222 = vpop.f32.mrf.mxu0
    %223 = vdwg.mxu0
    %v224 = vtanh.pop %v221
    %v225 = vpack.c.bf16 %v224, %v224
    %v226 = vld [vmem:[%s3] sm:$0xf]
    %v227 = vld [vmem:[%s3 + $0x4] sm:$0xf]
    %v228 = vld [vmem:[%s3 + $0x8] sm:$0xf]
    %v229 = vld [vmem:[%s3 + $0xc] sm:$0xf]
    %v230 = vld [vmem:[%s3 + $0x10] sm:$0xf]
    %v231 = vld [vmem:[%s3 + $0x14] sm:$0xf]
    %v232 = vld [vmem:[%s3 + $0x18] sm:$0xf]
    %v233 = vld [vmem:[%s3 + $0x1c] sm:$0xf]
    %v234 = vld [vmem:[%s3 + $0x20] sm:$0xf]
    %v235 = vld [vmem:[%s3 + $0x24] sm:$0xf]
    %v236 = vld [vmem:[%s3 + $0x28] sm:$0xf]
    %v237 = vld [vmem:[%s3 + $0x2c] sm:$0xf]
    %v238 = vld [vmem:[%s3 + $0x30] sm:$0xf]
    %v239 = vld [vmem:[%s3 + $0x34] sm:$0xf]
    %v240 = vld [vmem:[%s3 + $0x38] sm:$0xf]
    %v241 = vld [vmem:[%s3 + $0x3c] sm:$0xf]
    %v242 = vld [vmem:[%s4] sm:$0x1]
    %v244 = vperm.slane %v242, 0
    %v262 = vunpack.c.l.b16 %v226
    %v263 = vunpack.c.l.b16 %v227
    %v264 = vunpack.c.l.b16 %v228
    %v265 = vunpack.c.l.b16 %v229
    %v266 = vunpack.c.l.b16 %v230
    %v267 = vunpack.c.l.b16 %v231
    %v268 = vunpack.c.l.b16 %v232
    %v269 = vunpack.c.l.b16 %v233
    %v270 = vunpack.c.l.b16 %v234
    %v271 = vunpack.c.l.b16 %v235
    %v272 = vunpack.c.l.b16 %v236
    %v273 = vunpack.c.l.b16 %v237
    %v274 = vunpack.c.l.b16 %v238
    %v275 = vunpack.c.l.b16 %v239
    %v276 = vunpack.c.l.b16 %v240
    %v277 = vunpack.c.l.b16 %v241
    %v278 = vpack.c.b16 %v263, %v262
    %v279 = vpack.c.b16 %v265, %v264
    %v280 = vpack.c.b16 %v267, %v266
    %v281 = vpack.c.b16 %v269, %v268
    %v282 = vpack.c.b16 %v271, %v270
    %v283 = vpack.c.b16 %v273, %v272
    %v284 = vpack.c.b16 %v275, %v274
    %v285 = vpack.c.b16 %v277, %v276
    %294 = vmatpush.bf16.msra.mxu0 %v285
    %295 = vmatpush.bf16.msra.mxu0 %v284
    %296 = vmatpush.bf16.msra.mxu0 %v283
    %297 = vmatpush.bf16.msra.mxu0 %v282
    %298 = vmatpush.bf16.msra.mxu0 %v281
    %299 = vmatpush.bf16.msra.mxu0 %v280
    %300 = vmatpush.bf16.msra.mxu0 %v279
    %301 = vmatpush.bf16.msra.mxu0 %v278
    %302 = vmatmul.bf16.gmra.mxu0 %v225
    %v303 = vpop.f32.mrf.mxu0
    %v304 = vadd.f32 %v244, %v303
    %v305 = vpop.f32.mrf.mxu0
    %306 = vdwg.mxu0
    %v307 = vtanh.pop %v304
    %v308 = vpack.c.bf16 %v307, %v307
    %v309 = vld [vmem:[#allocation4] sm:$0xf]
    %v310 = vld [vmem:[#allocation4 + $0x4] sm:$0xf]
    %v311 = vld [vmem:[#allocation4 + $0x8] sm:$0xf]
    %v312 = vld [vmem:[#allocation4 + $0xc] sm:$0xf]
    %v313 = vld [vmem:[#allocation4 + $0x10] sm:$0xf]
    %v314 = vld [vmem:[#allocation4 + $0x14] sm:$0xf]
    %v315 = vld [vmem:[#allocation4 + $0x18] sm:$0xf]
    %v316 = vld [vmem:[#allocation4 + $0x1c] sm:$0xf]
    %v317 = vld [vmem:[#allocation4 + $0x20] sm:$0xf]
    %v318 = vld [vmem:[#allocation4 + $0x24] sm:$0xf]
    %v319 = vld [vmem:[#allocation4 + $0x28] sm:$0xf]
    %v320 = vld [vmem:[#allocation4 + $0x2c] sm:$0xf]
    %v321 = vld [vmem:[#allocation4 + $0x30] sm:$0xf]
    %v322 = vld [vmem:[#allocation4 + $0x34] sm:$0xf]
    %v323 = vld [vmem:[#allocation4 + $0x38] sm:$0xf]
    %v324 = vld [vmem:[#allocation4 + $0x3c] sm:$0xf]
    %v325 = vld [vmem:[%s6] sm:$0x1]
    %v327 = vperm.slane %v325, 0
    %v345 = vunpack.c.l.b16 %v309
    %v346 = vunpack.c.l.b16 %v310
    %v347 = vunpack.c.l.b16 %v311
    %v348 = vunpack.c.l.b16 %v312
    %v349 = vunpack.c.l.b16 %v313
    %v350 = vunpack.c.l.b16 %v314
    %v351 = vunpack.c.l.b16 %v315
    %v352 = vunpack.c.l.b16 %v316
    %v353 = vunpack.c.l.b16 %v317
    %v354 = vunpack.c.l.b16 %v318
    %v355 = vunpack.c.l.b16 %v319
    %v356 = vunpack.c.l.b16 %v320
    %v357 = vunpack.c.l.b16 %v321
    %v358 = vunpack.c.l.b16 %v322
    %v359 = vunpack.c.l.b16 %v323
    %v360 = vunpack.c.l.b16 %v324
    %v361 = vpack.c.b16 %v346, %v345
    %v362 = vpack.c.b16 %v348, %v347
    %v363 = vpack.c.b16 %v350, %v349
    %v364 = vpack.c.b16 %v352, %v351
    %v365 = vpack.c.b16 %v354, %v353
    %v366 = vpack.c.b16 %v356, %v355
    %v367 = vpack.c.b16 %v358, %v357
    %v368 = vpack.c.b16 %v360, %v359
    %377 = vmatpush.bf16.msra.mxu0 %v368
    %378 = vmatpush.bf16.msra.mxu0 %v367
    %379 = vmatpush.bf16.msra.mxu0 %v366
    %380 = vmatpush.bf16.msra.mxu0 %v365
    %381 = vmatpush.bf16.msra.mxu0 %v364
    %382 = vmatpush.bf16.msra.mxu0 %v363
    %383 = vmatpush.bf16.msra.mxu0 %v362
    %384 = vmatpush.bf16.msra.mxu0 %v361
    %385 = vmatmul.bf16.gmra.mxu0 %v308
    %v386 = vpop.f32.mrf.mxu0
    %v387 = vadd.f32 %v327, %v386
    %v388 = vpop.f32.mrf.mxu0
    %389 = vdwg.mxu0
    %390 = vmax.xlane.f32.xlu0 %v387
    %v391 = vpop.xlane.xlu0 %390
    %v392 = vsub.f32 %v387, %v391
    %v393 = vmul.f32 %v392, 1.442695
    %v394 = vpow.pop %v393
    %395 = vadd.xlane.f32.xlu0 %v394
    %v396 = vpop.xlane.xlu0 %395
    %v397 = vrcp.pop %v396
    %v398 = vmul.f32 %v394, %v397
    %399 = vst [vmem:[%s7] sm:$0xff] %v398
    // Predicated region
    $region38: #{fc_classifier_forward.1} parent=1 // pred_check
      _
    $region39: #{fc_classifier_forward.1} parent=1 // pred_check_branch
      %401 = sbr.rel (0) target = $region41
    $region40: #{fc_classifier_forward.1} parent=1 // pred_region
      _
    $region41: #{fc_classifier_forward.1} parent=1 // pred_fallthru
      _
    // Predicated region
    $region42: #{fc_classifier_forward.1} parent=1 // pred_check
      _
    $region43: #{fc_classifier_forward.1} parent=1 // pred_check_branch
      %403 = sbr.rel (0) target = $region45
    $region44: #{fc_classifier_forward.1} parent=1 // pred_region
      _
    $region45: #{fc_classifier_forward.1} parent=1 // pred_fallthru
      _
    %404 = vsyncpa [#allocation3], 1
    %405 = vsyncpa [#allocation5], 1

</llo_original>
